<compile_context>
chip_gen: v5e
topology: v5e:2x2
jax: 0.10.0
libtpu: 0.0.40
codegen_flags: <defaults>
</compile_context>

<pallas_src>
import jax
import jax.numpy as jnp
from jax import lax
from jax.experimental import pallas as pl
from jax.experimental.pallas import tpu as pltpu

EMBED = 384
HIDDEN = 64
OUT = 3
LN_EPS = 1e-5


def lstm_classifier_kernel(x_ref, wih_ref, b_ref, whh_ref,
                           w1_ref, b1_ref, w2_ref, b2_ref,
                           out_ref, xw_ref, hs_ref):
    S = x_ref.shape[0]
    H = HIDDEN

    # Input contribution to all gates for every timestep, with both LSTM biases
    # (and the 0.5 sigmoid pre-scale for the i/f/o columns) already folded in:
    # (S, 4H) on the MXU, done once outside the recurrence.
    xw_ref[...] = (jnp.dot(x_ref[...], wih_ref[...],
                           preferred_element_type=jnp.float32) + b_ref[...])

    # Hoist the recurrent weight out of the serial loop (single MXU RHS staging).
    whh = whh_ref[...]

    # Per-lane scale/offset turning tanh into sigmoid on the i/f/o lanes:
    # gate layout is PyTorch's [i, f, g, o]; g lanes are [2H, 3H).
    lane = lax.broadcasted_iota(jnp.int32, (1, 4 * H), 1)
    is_g = jnp.logical_and(lane >= 2 * H, lane < 3 * H)
    gate_scale = jnp.where(is_g, 1.0, 0.5).astype(jnp.float32)
    gate_shift = jnp.where(is_g, 0.0, 0.5).astype(jnp.float32)

    # Sequential LSTM recurrence.  One (1,64)@(64,256) matmul, one tanh over the
    # full gate slab, one fused scale/offset, one tanh(c_new) per step.
    def step(t, carry):
        h, c = carry
        gates = (jnp.dot(h, whh, preferred_element_type=jnp.float32)
                 + xw_ref[pl.ds(t, 1), :])
        act = jnp.tanh(gates) * gate_scale + gate_shift   # i,f,o=sigmoid, g=tanh
        i = act[:, 0:H]
        f = act[:, H:2 * H]
        g = act[:, 2 * H:3 * H]
        o = act[:, 3 * H:4 * H]
        c_new = f * c + i * g
        h_new = o * jnp.tanh(c_new)
        hs_ref[pl.ds(t, 1), :] = h_new
        return (h_new, c_new)

    h0 = jnp.zeros((1, H), jnp.float32)
    c0 = jnp.zeros((1, H), jnp.float32)
    # Bounded unroll: full unroll for small static S (LLO scheduling visibility),
    # unroll=8 otherwise to avoid instruction-memory / live-range blow-up.
    unroll = S if S <= 16 else 8
    lax.fori_loop(0, S, step, (h0, c0), unroll=unroll)

    hs = hs_ref[...]                      # (S, H) == lstm_out (== "final_hidden_state")

    # LayerNorm over hidden dim (biased variance, eps inside rsqrt — PyTorch
    # semantics).  The affine (ln_g, ln_b) is pre-folded into w1/b1 at init.
    mean = jnp.mean(hs, axis=-1, keepdims=True)
    var = jnp.mean(jnp.square(hs - mean), axis=-1, keepdims=True)
    normed = (hs - mean) * lax.rsqrt(var + LN_EPS)

    # TODO(synk): nn.Dropout layers are identity here (eval-mode semantics).

    # Classifier: Linear(H -> H//2, LayerNorm affine folded in) -> ReLU -> Linear(H//2 -> 3).
    h1 = jnp.maximum(
        jnp.dot(normed, w1_ref[...], preferred_element_type=jnp.float32) + b1_ref[...],
        0.0)
    logits = jnp.dot(h1, w2_ref[...], preferred_element_type=jnp.float32) + b2_ref[...]

    # Softmax over last dim.
    m = jnp.max(logits, axis=-1, keepdims=True)
    e = jnp.exp(logits - m)
    out_ref[...] = e / jnp.sum(e, axis=-1, keepdims=True)


def lstm_classifier(x, kernel_params):
    S = x.shape[0]
    H = HIDDEN
    vspec = pl.BlockSpec(memory_space=pltpu.MemorySpace.VMEM)

    # Advisory cost hint: this kernel is latency/overhead-dominated at small S.
    flops = (2 * S * EMBED * 4 * H          # x @ W_ih
             + 2 * S * H * 4 * H            # recurrence matmuls
             + 2 * S * H * (H // 2)         # classifier layer 1
             + 2 * S * (H // 2) * OUT)      # classifier layer 2
    transcendentals = S * (4 * H + H + OUT)  # gate tanh + tanh(c) + softmax exp
    weight_bytes = 4 * (EMBED * 4 * H + 4 * H + H * 4 * H
                        + H * (H // 2) + (H // 2) + (H // 2) * OUT + OUT)
    bytes_accessed = 4 * S * EMBED + weight_bytes + 4 * S * OUT

    return pl.pallas_call(
        lstm_classifier_kernel,
        out_shape=jax.ShapeDtypeStruct((S, OUT), jnp.float32),
        in_specs=[vspec] * 8,
        out_specs=vspec,
        scratch_shapes=[
            pltpu.VMEM((S, 4 * HIDDEN), jnp.float32),   # per-step input gate pre-activations
            pltpu.VMEM((S, HIDDEN), jnp.float32),       # lstm_out buffer
        ],
        cost_estimate=pl.CostEstimate(flops=flops,
                                      transcendentals=transcendentals,
                                      bytes_accessed=bytes_accessed),
    )(x, *kernel_params)


def _prescale_sigmoid_cols(w):
    """Scale the i/f/o gate columns (PyTorch order [i,f,g,o]) by 0.5 so the
    kernel can use sigmoid(z) = 0.5*tanh(z/2) + 0.5 with a single tanh."""
    H = HIDDEN
    return jnp.concatenate(
        [0.5 * w[:, 0:H], 0.5 * w[:, H:2 * H], w[:, 2 * H:3 * H], 0.5 * w[:, 3 * H:4 * H]],
        axis=1)


def init_params(key):
    """Generate PyTorch-style params, then re-layout for the kernel:
      * b_hh folded into b_ih (single gate bias),
      * i/f/o gate columns pre-scaled by 0.5 (tanh-based sigmoid),
      * LayerNorm affine folded into the first classifier Linear."""
    ks = jax.random.split(key, 10)
    scale = 0.1
    # LSTM weights (stored pre-transposed so the kernel does x @ W), PyTorch gate order [i,f,g,o].
    w_ih = scale * jax.random.normal(ks[0], (EMBED, 4 * HIDDEN), jnp.float32)
    b_ih = scale * jax.random.normal(ks[1], (1, 4 * HIDDEN), jnp.float32)
    w_hh = scale * jax.random.normal(ks[2], (HIDDEN, 4 * HIDDEN), jnp.float32)
    b_hh = scale * jax.random.normal(ks[3], (1, 4 * HIDDEN), jnp.float32)
    # LayerNorm affine.
    ln_g = jnp.ones((1, HIDDEN), jnp.float32)
    ln_b = jnp.zeros((1, HIDDEN), jnp.float32)
    # Classifier.
    w1 = scale * jax.random.normal(ks[4], (HIDDEN, HIDDEN // 2), jnp.float32)
    b1 = scale * jax.random.normal(ks[5], (1, HIDDEN // 2), jnp.float32)
    w2 = scale * jax.random.normal(ks[6], (HIDDEN // 2, OUT), jnp.float32)
    b2 = scale * jax.random.normal(ks[7], (1, OUT), jnp.float32)

    # Kernel layout.
    w_ih_k = _prescale_sigmoid_cols(w_ih)
    w_hh_k = _prescale_sigmoid_cols(w_hh)
    b_k = _prescale_sigmoid_cols(b_ih + b_hh)
    # Fold LayerNorm affine into classifier layer 1: LN(x)@w1+b1 == z@(ln_g.T*w1) + (ln_b@w1 + b1)
    w1_f = w1 * ln_g.reshape(HIDDEN, 1)
    b1_f = b1 + jnp.dot(ln_b, w1)
    return (w_ih_k, b_k, w_hh_k, w1_f, b1_f, w2, b2)


if __name__ == "__main__":
    key = jax.random.PRNGKey(0)
    k_x, k_p = jax.random.split(key)
    seq_len = 8
    x = jax.random.normal(k_x, (seq_len, EMBED), jnp.float32)
    params = init_params(k_p)
    out = lstm_classifier(x, params)
    out = jax.block_until_ready(out)
    assert out.shape == (seq_len, OUT)
    assert bool(jnp.all(jnp.isfinite(out)))
    # rows sum to 1 (softmax)
    assert bool(jnp.allclose(jnp.sum(out, axis=-1), 1.0, atol=1e-5))
    print("KERNEL_OK")
</pallas_src>

<mosaic_0001>
module attributes {stable_mosaic.version = 11 : i64} {
  func.func @lstm_classifier_kernel(%arg0: memref<8x384xf32, #tpu.memory_space<vmem>>, %arg1: memref<384x256xf32, #tpu.memory_space<vmem>>, %arg2: memref<1x256xf32, #tpu.memory_space<vmem>>, %arg3: memref<64x256xf32, #tpu.memory_space<vmem>>, %arg4: memref<64x32xf32, #tpu.memory_space<vmem>>, %arg5: memref<1x32xf32, #tpu.memory_space<vmem>>, %arg6: memref<32x3xf32, #tpu.memory_space<vmem>>, %arg7: memref<1x3xf32, #tpu.memory_space<vmem>>, %arg8: memref<8x3xf32, #tpu.memory_space<vmem>>, %arg9: memref<8x256xf32, #tpu.memory_space<vmem>>, %arg10: memref<8x64xf32, #tpu.memory_space<vmem>>) attributes {dimension_semantics = [], scalar_prefetch = 0 : i64, scratch_operands = 2 : i64, tpu.core_type = #tpu.core_type<tc>} {
    %c0 = arith.constant 0 : index
    %c0_0 = arith.constant 0 : index
    %0 = vector.load %arg0[%c0, %c0_0] : memref<8x384xf32, #tpu.memory_space<vmem>>, vector<8x384xf32>
    %c0_1 = arith.constant 0 : index
    %c0_2 = arith.constant 0 : index
    %1 = vector.load %arg1[%c0_1, %c0_2] : memref<384x256xf32, #tpu.memory_space<vmem>>, vector<384x256xf32>
    %cst = arith.constant dense<0.000000e+00> : vector<8x256xf32>
    %2 = tpu.matmul %0, %1, %cst {dimension_numbers = #tpu.dot_dimension_numbers<[1], [0], [0], [1], [0, 0, 1, 1], [], []>} : vector<8x384xf32>, vector<384x256xf32>, vector<8x256xf32> -> vector<8x256xf32>
    %c0_3 = arith.constant 0 : index
    %c0_4 = arith.constant 0 : index
    %3 = vector.load %arg2[%c0_3, %c0_4] : memref<1x256xf32, #tpu.memory_space<vmem>>, vector<1x256xf32>
    %4 = vector.broadcast %3 : vector<1x256xf32> to vector<8x256xf32>
    %5 = arith.addf %2, %4 : vector<8x256xf32>
    %c0_5 = arith.constant 0 : index
    %c0_6 = arith.constant 0 : index
    %6 = vector.load %arg9[%c0_5, %c0_6] : memref<8x256xf32, #tpu.memory_space<vmem>>, vector<8x256xf32>
    tpu.vector_store %arg9[%c0_5, %c0_6], %5 {strides = array<i32>} : memref<8x256xf32, #tpu.memory_space<vmem>>, vector<8x256xf32>,
    %c0_7 = arith.constant 0 : index
    %c0_8 = arith.constant 0 : index
    %7 = vector.load %arg3[%c0_7, %c0_8] : memref<64x256xf32, #tpu.memory_space<vmem>>, vector<64x256xf32>
    %8 = tpu.iota {dimensions = array<i32: 1>} : vector<1x256xi32>
    %c128_i32 = arith.constant 128 : i32
    %9 = vector.broadcast %c128_i32 : i32 to vector<1x256xi32>
    %10 = arith.cmpi sge, %8, %9 : vector<1x256xi32>
    %c192_i32 = arith.constant 192 : i32
    %11 = vector.broadcast %c192_i32 : i32 to vector<1x256xi32>
    %12 = arith.cmpi slt, %8, %11 : vector<1x256xi32>
    %13 = arith.andi %10, %12 : vector<1x256xi1>
    %cst_9 = arith.constant 1.000000e+00 : f32
    %cst_10 = arith.constant 5.000000e-01 : f32
    %14 = vector.broadcast %cst_9 : f32 to vector<1x256xf32>
    %15 = vector.broadcast %cst_10 : f32 to vector<1x256xf32>
    %16 = arith.select %13, %14, %15 : vector<1x256xi1>, vector<1x256xf32>
    %cst_11 = arith.constant 0.000000e+00 : f32
    %cst_12 = arith.constant 5.000000e-01 : f32
    %17 = vector.broadcast %cst_11 : f32 to vector<1x256xf32>
    %18 = vector.broadcast %cst_12 : f32 to vector<1x256xf32>
    %19 = arith.select %13, %17, %18 : vector<1x256xi1>, vector<1x256xf32>
    %cst_13 = arith.constant 0.000000e+00 : f32
    %20 = vector.broadcast %cst_13 : f32 to vector<1x64xf32>
    %cst_14 = arith.constant 0.000000e+00 : f32
    %21 = vector.broadcast %cst_14 : f32 to vector<1x64xf32>
    %c0_i32 = arith.constant 0 : i32
    %cst_15 = arith.constant dense<0.000000e+00> : vector<1x256xf32>
    %22 = tpu.matmul %20, %7, %cst_15 {dimension_numbers = #tpu.dot_dimension_numbers<[1], [0], [0], [1], [0, 0, 1, 1], [], []>} : vector<1x64xf32>, vector<64x256xf32>, vector<1x256xf32> -> vector<1x256xf32>
    %23 = arith.index_cast %c0_i32 : i32 to index
    %c0_16 = arith.constant 0 : index
    %24 = vector.load %arg9[%23, %c0_16] : memref<8x256xf32, #tpu.memory_space<vmem>>, vector<1x256xf32>
    %25 = arith.addf %22, %24 : vector<1x256xf32>
    %26 = math.tanh %25 : vector<1x256xf32>
    %27 = arith.mulf %26, %16 : vector<1x256xf32>
    %28 = arith.addf %27, %19 : vector<1x256xf32>
    %29 = vector.extract_strided_slice %28 {offsets = [0, 0], sizes = [1, 64], strides = [1, 1]} : vector<1x256xf32> to vector<1x64xf32>
    %30 = vector.extract_strided_slice %28 {offsets = [0, 64], sizes = [1, 64], strides = [1, 1]} : vector<1x256xf32> to vector<1x64xf32>
    %31 = vector.extract_strided_slice %28 {offsets = [0, 128], sizes = [1, 64], strides = [1, 1]} : vector<1x256xf32> to vector<1x64xf32>
    %32 = vector.extract_strided_slice %28 {offsets = [0, 192], sizes = [1, 64], strides = [1, 1]} : vector<1x256xf32> to vector<1x64xf32>
    %33 = arith.mulf %30, %21 : vector<1x64xf32>
    %34 = arith.mulf %29, %31 : vector<1x64xf32>
    %35 = arith.addf %33, %34 : vector<1x64xf32>
    %36 = math.tanh %35 : vector<1x64xf32>
    %37 = arith.mulf %32, %36 : vector<1x64xf32>
    %38 = arith.index_cast %c0_i32 : i32 to index
    %c0_17 = arith.constant 0 : index
    %39 = vector.load %arg10[%38, %c0_17] : memref<8x64xf32, #tpu.memory_space<vmem>>, vector<1x64xf32>
    tpu.vector_store %arg10[%38, %c0_17], %37 {strides = array<i32>} : memref<8x64xf32, #tpu.memory_space<vmem>>, vector<1x64xf32>,
    %c1_i32 = arith.constant 1 : i32
    %cst_18 = arith.constant dense<0.000000e+00> : vector<1x256xf32>
    %40 = tpu.matmul %37, %7, %cst_18 {dimension_numbers = #tpu.dot_dimension_numbers<[1], [0], [0], [1], [0, 0, 1, 1], [], []>} : vector<1x64xf32>, vector<64x256xf32>, vector<1x256xf32> -> vector<1x256xf32>
    %41 = arith.index_cast %c1_i32 : i32 to index
    %c0_19 = arith.constant 0 : index
    %42 = vector.load %arg9[%41, %c0_19] : memref<8x256xf32, #tpu.memory_space<vmem>>, vector<1x256xf32>
    %43 = arith.addf %40, %42 : vector<1x256xf32>
    %44 = math.tanh %43 : vector<1x256xf32>
    %45 = arith.mulf %44, %16 : vector<1x256xf32>
    %46 = arith.addf %45, %19 : vector<1x256xf32>
    %47 = vector.extract_strided_slice %46 {offsets = [0, 0], sizes = [1, 64], strides = [1, 1]} : vector<1x256xf32> to vector<1x64xf32>
    %48 = vector.extract_strided_slice %46 {offsets = [0, 64], sizes = [1, 64], strides = [1, 1]} : vector<1x256xf32> to vector<1x64xf32>
    %49 = vector.extract_strided_slice %46 {offsets = [0, 128], sizes = [1, 64], strides = [1, 1]} : vector<1x256xf32> to vector<1x64xf32>
    %50 = vector.extract_strided_slice %46 {offsets = [0, 192], sizes = [1, 64], strides = [1, 1]} : vector<1x256xf32> to vector<1x64xf32>
    %51 = arith.mulf %48, %35 : vector<1x64xf32>
    %52 = arith.mulf %47, %49 : vector<1x64xf32>
    %53 = arith.addf %51, %52 : vector<1x64xf32>
    %54 = math.tanh %53 : vector<1x64xf32>
    %55 = arith.mulf %50, %54 : vector<1x64xf32>
    %56 = arith.index_cast %c1_i32 : i32 to index
    %c0_20 = arith.constant 0 : index
    %57 = vector.load %arg10[%56, %c0_20] : memref<8x64xf32, #tpu.memory_space<vmem>>, vector<1x64xf32>
    tpu.vector_store %arg10[%56, %c0_20], %55 {strides = array<i32>} : memref<8x64xf32, #tpu.memory_space<vmem>>, vector<1x64xf32>,
    %c2_i32 = arith.constant 2 : i32
    %cst_21 = arith.constant dense<0.000000e+00> : vector<1x256xf32>
    %58 = tpu.matmul %55, %7, %cst_21 {dimension_numbers = #tpu.dot_dimension_numbers<[1], [0], [0], [1], [0, 0, 1, 1], [], []>} : vector<1x64xf32>, vector<64x256xf32>, vector<1x256xf32> -> vector<1x256xf32>
    %59 = arith.index_cast %c2_i32 : i32 to index
    %c0_22 = arith.constant 0 : index
    %60 = vector.load %arg9[%59, %c0_22] : memref<8x256xf32, #tpu.memory_space<vmem>>, vector<1x256xf32>
    %61 = arith.addf %58, %60 : vector<1x256xf32>
    %62 = math.tanh %61 : vector<1x256xf32>
    %63 = arith.mulf %62, %16 : vector<1x256xf32>
    %64 = arith.addf %63, %19 : vector<1x256xf32>
    %65 = vector.extract_strided_slice %64 {offsets = [0, 0], sizes = [1, 64], strides = [1, 1]} : vector<1x256xf32> to vector<1x64xf32>
    %66 = vector.extract_strided_slice %64 {offsets = [0, 64], sizes = [1, 64], strides = [1, 1]} : vector<1x256xf32> to vector<1x64xf32>
    %67 = vector.extract_strided_slice %64 {offsets = [0, 128], sizes = [1, 64], strides = [1, 1]} : vector<1x256xf32> to vector<1x64xf32>
    %68 = vector.extract_strided_slice %64 {offsets = [0, 192], sizes = [1, 64], strides = [1, 1]} : vector<1x256xf32> to vector<1x64xf32>
    %69 = arith.mulf %66, %53 : vector<1x64xf32>
    %70 = arith.mulf %65, %67 : vector<1x64xf32>
    %71 = arith.addf %69, %70 : vector<1x64xf32>
    %72 = math.tanh %71 : vector<1x64xf32>
    %73 = arith.mulf %68, %72 : vector<1x64xf32>
    %74 = arith.index_cast %c2_i32 : i32 to index
    %c0_23 = arith.constant 0 : index
    %75 = vector.load %arg10[%74, %c0_23] : memref<8x64xf32, #tpu.memory_space<vmem>>, vector<1x64xf32>
    tpu.vector_store %arg10[%74, %c0_23], %73 {strides = array<i32>} : memref<8x64xf32, #tpu.memory_space<vmem>>, vector<1x64xf32>,
    %c3_i32 = arith.constant 3 : i32
    %cst_24 = arith.constant dense<0.000000e+00> : vector<1x256xf32>
    %76 = tpu.matmul %73, %7, %cst_24 {dimension_numbers = #tpu.dot_dimension_numbers<[1], [0], [0], [1], [0, 0, 1, 1], [], []>} : vector<1x64xf32>, vector<64x256xf32>, vector<1x256xf32> -> vector<1x256xf32>
    %77 = arith.index_cast %c3_i32 : i32 to index
    %c0_25 = arith.constant 0 : index
    %78 = vector.load %arg9[%77, %c0_25] : memref<8x256xf32, #tpu.memory_space<vmem>>, vector<1x256xf32>
    %79 = arith.addf %76, %78 : vector<1x256xf32>
    %80 = math.tanh %79 : vector<1x256xf32>
    %81 = arith.mulf %80, %16 : vector<1x256xf32>
    %82 = arith.addf %81, %19 : vector<1x256xf32>
    %83 = vector.extract_strided_slice %82 {offsets = [0, 0], sizes = [1, 64], strides = [1, 1]} : vector<1x256xf32> to vector<1x64xf32>
    %84 = vector.extract_strided_slice %82 {offsets = [0, 64], sizes = [1, 64], strides = [1, 1]} : vector<1x256xf32> to vector<1x64xf32>
    %85 = vector.extract_strided_slice %82 {offsets = [0, 128], sizes = [1, 64], strides = [1, 1]} : vector<1x256xf32> to vector<1x64xf32>
    %86 = vector.extract_strided_slice %82 {offsets = [0, 192], sizes = [1, 64], strides = [1, 1]} : vector<1x256xf32> to vector<1x64xf32>
    %87 = arith.mulf %84, %71 : vector<1x64xf32>
    %88 = arith.mulf %83, %85 : vector<1x64xf32>
    %89 = arith.addf %87, %88 : vector<1x64xf32>
    %90 = math.tanh %89 : vector<1x64xf32>
    %91 = arith.mulf %86, %90 : vector<1x64xf32>
    %92 = arith.index_cast %c3_i32 : i32 to index
    %c0_26 = arith.constant 0 : index
    %93 = vector.load %arg10[%92, %c0_26] : memref<8x64xf32, #tpu.memory_space<vmem>>, vector<1x64xf32>
    tpu.vector_store %arg10[%92, %c0_26], %91 {strides = array<i32>} : memref<8x64xf32, #tpu.memory_space<vmem>>, vector<1x64xf32>,
    %c4_i32 = arith.constant 4 : i32
    %cst_27 = arith.constant dense<0.000000e+00> : vector<1x256xf32>
    %94 = tpu.matmul %91, %7, %cst_27 {dimension_numbers = #tpu.dot_dimension_numbers<[1], [0], [0], [1], [0, 0, 1, 1], [], []>} : vector<1x64xf32>, vector<64x256xf32>, vector<1x256xf32> -> vector<1x256xf32>
    %95 = arith.index_cast %c4_i32 : i32 to index
    %c0_28 = arith.constant 0 : index
    %96 = vector.load %arg9[%95, %c0_28] : memref<8x256xf32, #tpu.memory_space<vmem>>, vector<1x256xf32>
    %97 = arith.addf %94, %96 : vector<1x256xf32>
    %98 = math.tanh %97 : vector<1x256xf32>
    %99 = arith.mulf %98, %16 : vector<1x256xf32>
    %100 = arith.addf %99, %19 : vector<1x256xf32>
    %101 = vector.extract_strided_slice %100 {offsets = [0, 0], sizes = [1, 64], strides = [1, 1]} : vector<1x256xf32> to vector<1x64xf32>
    %102 = vector.extract_strided_slice %100 {offsets = [0, 64], sizes = [1, 64], strides = [1, 1]} : vector<1x256xf32> to vector<1x64xf32>
    %103 = vector.extract_strided_slice %100 {offsets = [0, 128], sizes = [1, 64], strides = [1, 1]} : vector<1x256xf32> to vector<1x64xf32>
    %104 = vector.extract_strided_slice %100 {offsets = [0, 192], sizes = [1, 64], strides = [1, 1]} : vector<1x256xf32> to vector<1x64xf32>
    %105 = arith.mulf %102, %89 : vector<1x64xf32>
    %106 = arith.mulf %101, %103 : vector<1x64xf32>
    %107 = arith.addf %105, %106 : vector<1x64xf32>
    %108 = math.tanh %107 : vector<1x64xf32>
    %109 = arith.mulf %104, %108 : vector<1x64xf32>
    %110 = arith.index_cast %c4_i32 : i32 to index
    %c0_29 = arith.constant 0 : index
    %111 = vector.load %arg10[%110, %c0_29] : memref<8x64xf32, #tpu.memory_space<vmem>>, vector<1x64xf32>
    tpu.vector_store %arg10[%110, %c0_29], %109 {strides = array<i32>} : memref<8x64xf32, #tpu.memory_space<vmem>>, vector<1x64xf32>,
    %c5_i32 = arith.constant 5 : i32
    %cst_30 = arith.constant dense<0.000000e+00> : vector<1x256xf32>
    %112 = tpu.matmul %109, %7, %cst_30 {dimension_numbers = #tpu.dot_dimension_numbers<[1], [0], [0], [1], [0, 0, 1, 1], [], []>} : vector<1x64xf32>, vector<64x256xf32>, vector<1x256xf32> -> vector<1x256xf32>
    %113 = arith.index_cast %c5_i32 : i32 to index
    %c0_31 = arith.constant 0 : index
    %114 = vector.load %arg9[%113, %c0_31] : memref<8x256xf32, #tpu.memory_space<vmem>>, vector<1x256xf32>
    %115 = arith.addf %112, %114 : vector<1x256xf32>
    %116 = math.tanh %115 : vector<1x256xf32>
    %117 = arith.mulf %116, %16 : vector<1x256xf32>
    %118 = arith.addf %117, %19 : vector<1x256xf32>
    %119 = vector.extract_strided_slice %118 {offsets = [0, 0], sizes = [1, 64], strides = [1, 1]} : vector<1x256xf32> to vector<1x64xf32>
    %120 = vector.extract_strided_slice %118 {offsets = [0, 64], sizes = [1, 64], strides = [1, 1]} : vector<1x256xf32> to vector<1x64xf32>
    %121 = vector.extract_strided_slice %118 {offsets = [0, 128], sizes = [1, 64], strides = [1, 1]} : vector<1x256xf32> to vector<1x64xf32>
    %122 = vector.extract_strided_slice %118 {offsets = [0, 192], sizes = [1, 64], strides = [1, 1]} : vector<1x256xf32> to vector<1x64xf32>
    %123 = arith.mulf %120, %107 : vector<1x64xf32>
    %124 = arith.mulf %119, %121 : vector<1x64xf32>
    %125 = arith.addf %123, %124 : vector<1x64xf32>
    %126 = math.tanh %125 : vector<1x64xf32>
    %127 = arith.mulf %122, %126 : vector<1x64xf32>
    %128 = arith.index_cast %c5_i32 : i32 to index
    %c0_32 = arith.constant 0 : index
    %129 = vector.load %arg10[%128, %c0_32] : memref<8x64xf32, #tpu.memory_space<vmem>>, vector<1x64xf32>
    tpu.vector_store %arg10[%128, %c0_32], %127 {strides = array<i32>} : memref<8x64xf32, #tpu.memory_space<vmem>>, vector<1x64xf32>,
    %c6_i32 = arith.constant 6 : i32
    %cst_33 = arith.constant dense<0.000000e+00> : vector<1x256xf32>
    %130 = tpu.matmul %127, %7, %cst_33 {dimension_numbers = #tpu.dot_dimension_numbers<[1], [0], [0], [1], [0, 0, 1, 1], [], []>} : vector<1x64xf32>, vector<64x256xf32>, vector<1x256xf32> -> vector<1x256xf32>
    %131 = arith.index_cast %c6_i32 : i32 to index
    %c0_34 = arith.constant 0 : index
    %132 = vector.load %arg9[%131, %c0_34] : memref<8x256xf32, #tpu.memory_space<vmem>>, vector<1x256xf32>
    %133 = arith.addf %130, %132 : vector<1x256xf32>
    %134 = math.tanh %133 : vector<1x256xf32>
    %135 = arith.mulf %134, %16 : vector<1x256xf32>
    %136 = arith.addf %135, %19 : vector<1x256xf32>
    %137 = vector.extract_strided_slice %136 {offsets = [0, 0], sizes = [1, 64], strides = [1, 1]} : vector<1x256xf32> to vector<1x64xf32>
    %138 = vector.extract_strided_slice %136 {offsets = [0, 64], sizes = [1, 64], strides = [1, 1]} : vector<1x256xf32> to vector<1x64xf32>
    %139 = vector.extract_strided_slice %136 {offsets = [0, 128], sizes = [1, 64], strides = [1, 1]} : vector<1x256xf32> to vector<1x64xf32>
    %140 = vector.extract_strided_slice %136 {offsets = [0, 192], sizes = [1, 64], strides = [1, 1]} : vector<1x256xf32> to vector<1x64xf32>
    %141 = arith.mulf %138, %125 : vector<1x64xf32>
    %142 = arith.mulf %137, %139 : vector<1x64xf32>
    %143 = arith.addf %141, %142 : vector<1x64xf32>
    %144 = math.tanh %143 : vector<1x64xf32>
    %145 = arith.mulf %140, %144 : vector<1x64xf32>
    %146 = arith.index_cast %c6_i32 : i32 to index
    %c0_35 = arith.constant 0 : index
    %147 = vector.load %arg10[%146, %c0_35] : memref<8x64xf32, #tpu.memory_space<vmem>>, vector<1x64xf32>
    tpu.vector_store %arg10[%146, %c0_35], %145 {strides = array<i32>} : memref<8x64xf32, #tpu.memory_space<vmem>>, vector<1x64xf32>,
    %c7_i32 = arith.constant 7 : i32
    %cst_36 = arith.constant dense<0.000000e+00> : vector<1x256xf32>
    %148 = tpu.matmul %145, %7, %cst_36 {dimension_numbers = #tpu.dot_dimension_numbers<[1], [0], [0], [1], [0, 0, 1, 1], [], []>} : vector<1x64xf32>, vector<64x256xf32>, vector<1x256xf32> -> vector<1x256xf32>
    %149 = arith.index_cast %c7_i32 : i32 to index
    %c0_37 = arith.constant 0 : index
    %150 = vector.load %arg9[%149, %c0_37] : memref<8x256xf32, #tpu.memory_space<vmem>>, vector<1x256xf32>
    %151 = arith.addf %148, %150 : vector<1x256xf32>
    %152 = math.tanh %151 : vector<1x256xf32>
    %153 = arith.mulf %152, %16 : vector<1x256xf32>
    %154 = arith.addf %153, %19 : vector<1x256xf32>
    %155 = vector.extract_strided_slice %154 {offsets = [0, 0], sizes = [1, 64], strides = [1, 1]} : vector<1x256xf32> to vector<1x64xf32>
    %156 = vector.extract_strided_slice %154 {offsets = [0, 64], sizes = [1, 64], strides = [1, 1]} : vector<1x256xf32> to vector<1x64xf32>
    %157 = vector.extract_strided_slice %154 {offsets = [0, 128], sizes = [1, 64], strides = [1, 1]} : vector<1x256xf32> to vector<1x64xf32>
    %158 = vector.extract_strided_slice %154 {offsets = [0, 192], sizes = [1, 64], strides = [1, 1]} : vector<1x256xf32> to vector<1x64xf32>
    %159 = arith.mulf %156, %143 : vector<1x64xf32>
    %160 = arith.mulf %155, %157 : vector<1x64xf32>
    %161 = arith.addf %159, %160 : vector<1x64xf32>
    %162 = math.tanh %161 : vector<1x64xf32>
    %163 = arith.mulf %158, %162 : vector<1x64xf32>
    %164 = arith.index_cast %c7_i32 : i32 to index
    %c0_38 = arith.constant 0 : index
    %165 = vector.load %arg10[%164, %c0_38] : memref<8x64xf32, #tpu.memory_space<vmem>>, vector<1x64xf32>
    tpu.vector_store %arg10[%164, %c0_38], %163 {strides = array<i32>} : memref<8x64xf32, #tpu.memory_space<vmem>>, vector<1x64xf32>,
    %c8_i32 = arith.constant 8 : i32
    %c0_39 = arith.constant 0 : index
    %c0_40 = arith.constant 0 : index
    %166 = vector.load %arg10[%c0_39, %c0_40] : memref<8x64xf32, #tpu.memory_space<vmem>>, vector<8x64xf32>
    %cst_41 = arith.constant dense<0.000000e+00> : vector<8xf32>
    %167 = vector.multi_reduction <add>, %166, %cst_41 [1] : vector<8x64xf32> to vector<8xf32>
    %168 = vector.shape_cast %167 : vector<8xf32> to vector<8x1xf32>
    %cst_42 = arith.constant 6.400000e+01 : f32
    %169 = vector.broadcast %cst_42 : f32 to vector<8x1xf32>
    %170 = arith.divf %168, %169 : vector<8x1xf32>
    %171 = vector.broadcast %170 : vector<8x1xf32> to vector<8x64xf32>
    %172 = arith.subf %166, %171 : vector<8x64xf32>
    %173 = arith.mulf %172, %172 : vector<8x64xf32>
    %cst_43 = arith.constant dense<0.000000e+00> : vector<8xf32>
    %174 = vector.multi_reduction <add>, %173, %cst_43 [1] : vector<8x64xf32> to vector<8xf32>
    %175 = vector.shape_cast %174 : vector<8xf32> to vector<8x1xf32>
    %cst_44 = arith.constant 6.400000e+01 : f32
    %176 = vector.broadcast %cst_44 : f32 to vector<8x1xf32>
    %177 = arith.divf %175, %176 : vector<8x1xf32>
    %178 = vector.broadcast %170 : vector<8x1xf32> to vector<8x64xf32>
    %179 = arith.subf %166, %178 : vector<8x64xf32>
    %cst_45 = arith.constant 9.99999974E-6 : f32
    %180 = vector.broadcast %cst_45 : f32 to vector<8x1xf32>
    %181 = arith.addf %177, %180 : vector<8x1xf32>
    %182 = math.rsqrt %181 : vector<8x1xf32>
    %183 = vector.broadcast %182 : vector<8x1xf32> to vector<8x64xf32>
    %184 = arith.mulf %179, %183 : vector<8x64xf32>
    %c0_46 = arith.constant 0 : index
    %c0_47 = arith.constant 0 : index
    %185 = vector.load %arg4[%c0_46, %c0_47] : memref<64x32xf32, #tpu.memory_space<vmem>>, vector<64x32xf32>
    %cst_48 = arith.constant dense<0.000000e+00> : vector<8x32xf32>
    %186 = tpu.matmul %184, %185, %cst_48 {dimension_numbers = #tpu.dot_dimension_numbers<[1], [0], [0], [1], [0, 0, 1, 1], [], []>} : vector<8x64xf32>, vector<64x32xf32>, vector<8x32xf32> -> vector<8x32xf32>
    %c0_49 = arith.constant 0 : index
    %c0_50 = arith.constant 0 : index
    %187 = vector.load %arg5[%c0_49, %c0_50] : memref<1x32xf32, #tpu.memory_space<vmem>>, vector<1x32xf32>
    %188 = vector.broadcast %187 : vector<1x32xf32> to vector<8x32xf32>
    %189 = arith.addf %186, %188 : vector<8x32xf32>
    %cst_51 = arith.constant 0.000000e+00 : f32
    %190 = vector.broadcast %cst_51 : f32 to vector<8x32xf32>
    %191 = arith.maximumf %189, %190 : vector<8x32xf32>
    %c0_52 = arith.constant 0 : index
    %c0_53 = arith.constant 0 : index
    %192 = vector.load %arg6[%c0_52, %c0_53] : memref<32x3xf32, #tpu.memory_space<vmem>>, vector<32x3xf32>
    %cst_54 = arith.constant dense<0.000000e+00> : vector<8x3xf32>
    %193 = tpu.matmul %191, %192, %cst_54 {dimension_numbers = #tpu.dot_dimension_numbers<[1], [0], [0], [1], [0, 0, 1, 1], [], []>} : vector<8x32xf32>, vector<32x3xf32>, vector<8x3xf32> -> vector<8x3xf32>
    %c0_55 = arith.constant 0 : index
    %c0_56 = arith.constant 0 : index
    %194 = vector.load %arg7[%c0_55, %c0_56] : memref<1x3xf32, #tpu.memory_space<vmem>>, vector<1x3xf32>
    %195 = vector.broadcast %194 : vector<1x3xf32> to vector<8x3xf32>
    %196 = arith.addf %193, %195 : vector<8x3xf32>
    %cst_57 = arith.constant dense<0xFF800000> : vector<8xf32>
    %197 = vector.multi_reduction <maximumf>, %196, %cst_57 [1] : vector<8x3xf32> to vector<8xf32>
    %198 = vector.shape_cast %197 : vector<8xf32> to vector<8x1xf32>
    %199 = vector.broadcast %198 : vector<8x1xf32> to vector<8x3xf32>
    %200 = arith.subf %196, %199 : vector<8x3xf32>
    %201 = math.exp %200 : vector<8x3xf32>
    %cst_58 = arith.constant dense<0.000000e+00> : vector<8xf32>
    %202 = vector.multi_reduction <add>, %201, %cst_58 [1] : vector<8x3xf32> to vector<8xf32>
    %203 = vector.shape_cast %202 : vector<8xf32> to vector<8x1xf32>
    %204 = vector.broadcast %203 : vector<8x1xf32> to vector<8x3xf32>
    %205 = arith.divf %201, %204 : vector<8x3xf32>
    %c0_59 = arith.constant 0 : index
    %c0_60 = arith.constant 0 : index
    %206 = vector.load %arg8[%c0_59, %c0_60] : memref<8x3xf32, #tpu.memory_space<vmem>>, vector<8x3xf32>
    tpu.vector_store %arg8[%c0_59, %c0_60], %205 {strides = array<i32>} : memref<8x3xf32, #tpu.memory_space<vmem>>, vector<8x3xf32>,
    return
  }
}

</mosaic_0001>

<llo_original>
// kernel: tpu_custom_call.1
$region0: #{tpu_custom_call.1}
  #allocation0 [shape = 'u32[]', space=smem, size = 0x4, offset = 0x4, fixed_abs, tag = 'smem constant byte address 0x4 - core index']
  #allocation1 [shape = 'u32[72,128]{1,0:T(1,128)}', space=vmem, size = 0x9000, scoped, tag = 'internal scratch']
  #allocation2 [shape = 'f32[8,256]{1,0:T(8,128)}', space=vmem, size = 0x2000, scoped, tag = 'scratch operand']
  #allocation3 [shape = 'f32[8,64]{1,0:T(8,128)}', space=vmem, size = 0x1000, scoped, tag = 'scratch operand']
  %s0 = inlined_call_operand.hbm [shape: f32[8,384], index: 0, kind: input, shape index: {}]
  %s1 = inlined_call_operand.hbm [shape: f32[384,256], index: 1, kind: input, shape index: {}]
  %s2 = inlined_call_operand.vmem [shape: f32[1,256], index: 2, kind: input, shape index: {}]
  %s3 = inlined_call_operand.vmem [shape: f32[64,256], index: 3, kind: input, shape index: {}]
  %s4 = inlined_call_operand.vmem [shape: f32[64,32], index: 4, kind: input, shape index: {}]
  %s5 = inlined_call_operand.vmem [shape: f32[1,32], index: 5, kind: input, shape index: {}]
  %s6 = inlined_call_operand.vmem [shape: f32[32,3], index: 6, kind: input, shape index: {}]
  %s7 = inlined_call_operand.vmem [shape: f32[1,3], index: 7, kind: input, shape index: {}]
  %s8 = inlined_call_operand.vmem [shape: f32[8,3], index: 8, kind: output, shape index: {}]
  %s9 = sld [smem:[#allocation0]]
  $region50: #{tpu_custom_call.1} parent=0
    _
  %s11 = ssub.s32 1, %s9
  %s12 = scalar_select 0, %s11, %s9
  $region1: #{tpu_custom_call.1} parent=0
    #allocation4 [shape = 'u8[12288]{0}', space=vmem, size = 0x3000, scoped, tag = 'input window, operand 0, single buffered']
    #allocation5 [shape = 's32[1]{0}', space=sflag, size = 0x4, scoped, tag = 'scoped memory for tpu_custom_call.1']
    #allocation6 [shape = 'u8[393216]{0}', space=vmem, size = 0x60000, scoped, tag = 'input window, operand 1, single buffered']
    #allocation7 [shape = 's32[1]{0}', space=sflag, size = 0x4, scoped, tag = 'scoped memory for tpu_custom_call.1']
    %13 = vsyncpa [#allocation5], 0
    %14 = vsyncpa [#allocation7], 0
    // Predicated region
    $region2: #{tpu_custom_call.1} parent=1 // pred_check
      _
    $region3: #{tpu_custom_call.1} parent=1 // pred_check_branch
      %16 = sbr.rel (0) target = $region5
    $region4: #{tpu_custom_call.1} parent=1 // pred_region
      %18 = vsyncadd [#allocation5], 0
      %s20 = sshll.u32 %s0, 4
      %s21 = int_to_ptr.hbm [resolvable:$true] %s20
      %s22 = sshll.u32 [#allocation4], 4
      %s23 = int_to_ptr.vmem [resolvable:$true] %s22
      %25 = dma.hbm_to_vmem [thread:$0]  %s21, 384, %s23, [#allocation5]
    $region5: #{tpu_custom_call.1} parent=1 // pred_fallthru
      _
    // Predicated region
    $region6: #{tpu_custom_call.1} parent=1 // pred_check
      _
    $region7: #{tpu_custom_call.1} parent=1 // pred_check_branch
      %27 = sbr.rel (0) target = $region9
    $region8: #{tpu_custom_call.1} parent=1 // pred_region
      %29 = vsyncadd [#allocation7], 0
      %s30 = sshll.u32 %s1, 4
      %s31 = int_to_ptr.hbm [resolvable:$true] %s30
      %s32 = sshll.u32 [#allocation6], 4
      %s33 = int_to_ptr.vmem [resolvable:$true] %s32
      %38 = dma.hbm_to_vmem [thread:$0]  %s31, 12288, %s33, [#allocation7], 256, 256, 16
    $region9: #{tpu_custom_call.1} parent=1 // pred_fallthru
      _
    // Predicated region
    $region10: #{tpu_custom_call.1} parent=1 // pred_check
      _
    $region11: #{tpu_custom_call.1} parent=1 // pred_check_branch
      %40 = sbr.rel (0) target = $region13
    $region12: #{tpu_custom_call.1} parent=1 // pred_region
      _
    $region13: #{tpu_custom_call.1} parent=1 // pred_fallthru
      _
    // Predicated region
    $region14: #{tpu_custom_call.1} parent=1 // pred_check
      _
    $region15: #{tpu_custom_call.1} parent=1 // pred_check_branch
      %42 = sbr.rel (0) target = $region17
    $region16: #{tpu_custom_call.1} parent=1 // pred_region
      _
    $region17: #{tpu_custom_call.1} parent=1 // pred_fallthru
      _
    // Predicated region
    $region18: #{tpu_custom_call.1} parent=1 // pred_check
      _
    $region19: #{tpu_custom_call.1} parent=1 // pred_check_branch
      %44 = sbr.rel (0) target = $region21
    $region20: #{tpu_custom_call.1} parent=1 // pred_region
      _
    $region21: #{tpu_custom_call.1} parent=1 // pred_fallthru
      _
    // Predicated region
    $region22: #{tpu_custom_call.1} parent=1 // pred_check
      _
    $region23: #{tpu_custom_call.1} parent=1 // pred_check_branch
      %46 = sbr.rel (0) target = $region25
    $region24: #{tpu_custom_call.1} parent=1 // pred_region
      _
    $region25: #{tpu_custom_call.1} parent=1 // pred_fallthru
      _
    // Predicated region
    $region26: #{tpu_custom_call.1} parent=1 // pred_check
      _
    $region27: #{tpu_custom_call.1} parent=1 // pred_check_branch
      %48 = sbr.rel (0) target = $region29
    $region28: #{tpu_custom_call.1} parent=1 // pred_region
      _
    $region29: #{tpu_custom_call.1} parent=1 // pred_fallthru
      _
    // Predicated region
    $region30: #{tpu_custom_call.1} parent=1 // pred_check
      _
    $region31: #{tpu_custom_call.1} parent=1 // pred_check_branch
      %50 = sbr.rel (0) target = $region33
    $region32: #{tpu_custom_call.1} parent=1 // pred_region
      _
    $region33: #{tpu_custom_call.1} parent=1 // pred_fallthru
      _
    // Predicated region
    $region34: #{tpu_custom_call.1} parent=1 // pred_check
      _
    $region35: #{tpu_custom_call.1} parent=1 // pred_check_branch
      %52 = sbr.rel (0) target = $region37
    $region36: #{tpu_custom_call.1} parent=1 // pred_region
      %54 = dma.done [#allocation5], 384
    $region37: #{tpu_custom_call.1} parent=1 // pred_fallthru
      _
    // Predicated region
    $region38: #{tpu_custom_call.1} parent=1 // pred_check
      _
    $region39: #{tpu_custom_call.1} parent=1 // pred_check_branch
      %56 = sbr.rel (0) target = $region41
    $region40: #{tpu_custom_call.1} parent=1 // pred_region
      %58 = dma.done [#allocation7], 12288
    $region41: #{tpu_custom_call.1} parent=1 // pred_fallthru
      _
    %v59 = vld [vmem:[#allocation4] sm:$0xff]
    %v60 = vld [vmem:[#allocation4 + $0x8] sm:$0xff]
    %v61 = vld [vmem:[#allocation4 + $0x10] sm:$0xff]
    %v62 = vld [vmem:[#allocation6] sm:$0xff]
    %v63 = vld [vmem:[#allocation6 + $0x8] sm:$0xff]
    %v64 = vld [vmem:[#allocation6 + $0x10] sm:$0xff]
    %v65 = vld [vmem:[#allocation6 + $0x18] sm:$0xff]
    %v66 = vld [vmem:[#allocation6 + $0x20] sm:$0xff]
    %v67 = vld [vmem:[#allocation6 + $0x28] sm:$0xff]
    %v68 = vld [vmem:[#allocation6 + $0x30] sm:$0xff]
    %v69 = vld [vmem:[#allocation6 + $0x38] sm:$0xff]
    %v70 = vld [vmem:[#allocation6 + $0x40] sm:$0xff]
    %v71 = vld [vmem:[#allocation6 + $0x48] sm:$0xff]
    %v72 = vld [vmem:[#allocation6 + $0x50] sm:$0xff]
    %v73 = vld [vmem:[#allocation6 + $0x58] sm:$0xff]
    %v74 = vld [vmem:[#allocation6 + $0x60] sm:$0xff]
    %v75 = vld [vmem:[#allocation6 + $0x68] sm:$0xff]
    %v76 = vld [vmem:[#allocation6 + $0x70] sm:$0xff]
    %v77 = vld [vmem:[#allocation6 + $0x78] sm:$0xff]
    %v78 = vld [vmem:[#allocation6 + $0x80] sm:$0xff]
    %v79 = vld [vmem:[#allocation6 + $0x88] sm:$0xff]
    %v80 = vld [vmem:[#allocation6 + $0x90] sm:$0xff]
    %v81 = vld [vmem:[#allocation6 + $0x98] sm:$0xff]
    %v82 = vld [vmem:[#allocation6 + $0xa0] sm:$0xff]
    %v83 = vld [vmem:[#allocation6 + $0xa8] sm:$0xff]
    %v84 = vld [vmem:[#allocation6 + $0xb0] sm:$0xff]
    %v85 = vld [vmem:[#allocation6 + $0xb8] sm:$0xff]
    %v86 = vld [vmem:[#allocation6 + $0xc0] sm:$0xff]
    %v87 = vld [vmem:[#allocation6 + $0xc8] sm:$0xff]
    %v88 = vld [vmem:[#allocation6 + $0xd0] sm:$0xff]
    %v89 = vld [vmem:[#allocation6 + $0xd8] sm:$0xff]
    %v90 = vld [vmem:[#allocation6 + $0xe0] sm:$0xff]
    %v91 = vld [vmem:[#allocation6 + $0xe8] sm:$0xff]
    %v92 = vld [vmem:[#allocation6 + $0xf0] sm:$0xff]
    %v93 = vld [vmem:[#allocation6 + $0xf8] sm:$0xff]
    %v94 = vld [vmem:[#allocation6 + $0x100] sm:$0xff]
    %v95 = vld [vmem:[#allocation6 + $0x108] sm:$0xff]
    %v96 = vld [vmem:[#allocation6 + $0x110] sm:$0xff]
    %v97 = vld [vmem:[#allocation6 + $0x118] sm:$0xff]
    %v98 = vld [vmem:[#allocation6 + $0x120] sm:$0xff]
    %v99 = vld [vmem:[#allocation6 + $0x128] sm:$0xff]
    %v100 = vld [vmem:[#allocation6 + $0x130] sm:$0xff]
    %v101 = vld [vmem:[#allocation6 + $0x138] sm:$0xff]
    %v102 = vld [vmem:[#allocation6 + $0x140] sm:$0xff]
    %v103 = vld [vmem:[#allocation6 + $0x148] sm:$0xff]
    %v104 = vld [vmem:[#allocation6 + $0x150] sm:$0xff]
    %v105 = vld [vmem:[#allocation6 + $0x158] sm:$0xff]
    %v106 = vld [vmem:[#allocation6 + $0x160] sm:$0xff]
    %v107 = vld [vmem:[#allocation6 + $0x168] sm:$0xff]
    %v108 = vld [vmem:[#allocation6 + $0x170] sm:$0xff]
    %v109 = vld [vmem:[#allocation6 + $0x178] sm:$0xff]
    %v110 = vld [vmem:[#allocation6 + $0x180] sm:$0xff]
    %v111 = vld [vmem:[#allocation6 + $0x188] sm:$0xff]
    %v112 = vld [vmem:[#allocation6 + $0x190] sm:$0xff]
    %v113 = vld [vmem:[#allocation6 + $0x198] sm:$0xff]
    %v114 = vld [vmem:[#allocation6 + $0x1a0] sm:$0xff]
    %v115 = vld [vmem:[#allocation6 + $0x1a8] sm:$0xff]
    %v116 = vld [vmem:[#allocation6 + $0x1b0] sm:$0xff]
    %v117 = vld [vmem:[#allocation6 + $0x1b8] sm:$0xff]
    %v118 = vld [vmem:[#allocation6 + $0x1c0] sm:$0xff]
    %v119 = vld [vmem:[#allocation6 + $0x1c8] sm:$0xff]
    %v120 = vld [vmem:[#allocation6 + $0x1d0] sm:$0xff]
    %v121 = vld [vmem:[#allocation6 + $0x1d8] sm:$0xff]
    %v122 = vld [vmem:[#allocation6 + $0x1e0] sm:$0xff]
    %v123 = vld [vmem:[#allocation6 + $0x1e8] sm:$0xff]
    %v124 = vld [vmem:[#allocation6 + $0x1f0] sm:$0xff]
    %v125 = vld [vmem:[#allocation6 + $0x1f8] sm:$0xff]
    %v126 = vld [vmem:[#allocation6 + $0x200] sm:$0xff]
    %v127 = vld [vmem:[#allocation6 + $0x208] sm:$0xff]
    %v128 = vld [vmem:[#allocation6 + $0x210] sm:$0xff]
    %v129 = vld [vmem:[#allocation6 + $0x218] sm:$0xff]
    %v130 = vld [vmem:[#allocation6 + $0x220] sm:$0xff]
    %v131 = vld [vmem:[#allocation6 + $0x228] sm:$0xff]
    %v132 = vld [vmem:[#allocation6 + $0x230] sm:$0xff]
    %v133 = vld [vmem:[#allocation6 + $0x238] sm:$0xff]
    %v134 = vld [vmem:[#allocation6 + $0x240] sm:$0xff]
    %v135 = vld [vmem:[#allocation6 + $0x248] sm:$0xff]
    %v136 = vld [vmem:[#allocation6 + $0x250] sm:$0xff]
    %v137 = vld [vmem:[#allocation6 + $0x258] sm:$0xff]
    %v138 = vld [vmem:[#allocation6 + $0x260] sm:$0xff]
    %v139 = vld [vmem:[#allocation6 + $0x268] sm:$0xff]
    %v140 = vld [vmem:[#allocation6 + $0x270] sm:$0xff]
    %v141 = vld [vmem:[#allocation6 + $0x278] sm:$0xff]
    %v142 = vld [vmem:[#allocation6 + $0x280] sm:$0xff]
    %v143 = vld [vmem:[#allocation6 + $0x288] sm:$0xff]
    %v144 = vld [vmem:[#allocation6 + $0x290] sm:$0xff]
    %v145 = vld [vmem:[#allocation6 + $0x298] sm:$0xff]
    %v146 = vld [vmem:[#allocation6 + $0x2a0] sm:$0xff]
    %v147 = vld [vmem:[#allocation6 + $0x2a8] sm:$0xff]
    %v148 = vld [vmem:[#allocation6 + $0x2b0] sm:$0xff]
    %v149 = vld [vmem:[#allocation6 + $0x2b8] sm:$0xff]
    %v150 = vld [vmem:[#allocation6 + $0x2c0] sm:$0xff]
    %v151 = vld [vmem:[#allocation6 + $0x2c8] sm:$0xff]
    %v152 = vld [vmem:[#allocation6 + $0x2d0] sm:$0xff]
    %v153 = vld [vmem:[#allocation6 + $0x2d8] sm:$0xff]
    %v154 = vld [vmem:[#allocation6 + $0x2e0] sm:$0xff]
    %v155 = vld [vmem:[#allocation6 + $0x2e8] sm:$0xff]
    %v156 = vld [vmem:[#allocation6 + $0x2f0] sm:$0xff]
    %v157 = vld [vmem:[#allocation6 + $0x2f8] sm:$0xff]
    %v158 = vld [vmem:[%s2] sm:$0x3]
    %v160 = vperm.slane %v158, 0
    %v161 = vperm.slane %v158, 1
    %164 = vmatpush.msra.mxu0 %v92
    %165 = vmatpush.msra.mxu0 %v90
    %166 = vmatpush.msra.mxu0 %v88
    %167 = vmatpush.msra.mxu0 %v86
    %168 = vmatpush.msra.mxu0 %v84
    %169 = vmatpush.msra.mxu0 %v82
    %170 = vmatpush.msra.mxu0 %v80
    %171 = vmatpush.msra.mxu0 %v78
    %172 = vmatpush.msra.mxu0 %v76
    %173 = vmatpush.msra.mxu0 %v74
    %174 = vmatpush.msra.mxu0 %v72
    %175 = vmatpush.msra.mxu0 %v70
    %176 = vmatpush.msra.mxu0 %v68
    %177 = vmatpush.msra.mxu0 %v66
    %178 = vmatpush.msra.mxu0 %v64
    %179 = vmatpush.msra.mxu0 %v62
    %180 = vmatmul.f32.gmra.mxu0 %v59
    %v181 = vpop.f32.mrf.mxu0
    %v182 = vadd.f32 %v160, %v181
    %183 = vdwg.mxu0
    %184 = vmatpush.msra.mxu0 %v124
    %185 = vmatpush.msra.mxu0 %v122
    %186 = vmatpush.msra.mxu0 %v120
    %187 = vmatpush.msra.mxu0 %v118
    %188 = vmatpush.msra.mxu0 %v116
    %189 = vmatpush.msra.mxu0 %v114
    %190 = vmatpush.msra.mxu0 %v112
    %191 = vmatpush.msra.mxu0 %v110
    %192 = vmatpush.msra.mxu0 %v108
    %193 = vmatpush.msra.mxu0 %v106
    %194 = vmatpush.msra.mxu0 %v104
    %195 = vmatpush.msra.mxu0 %v102
    %196 = vmatpush.msra.mxu0 %v100
    %197 = vmatpush.msra.mxu0 %v98
    %198 = vmatpush.msra.mxu0 %v96
    %199 = vmatpush.msra.mxu0 %v94
    %200 = vmatmul.f32.gmra.mxu0 %v60
    %v201 = vpop.f32.mrf.mxu0
    %v202 = vadd.f32 %v182, %v201
    %203 = vdwg.mxu0
    %204 = vmatpush.msra.mxu0 %v156
    %205 = vmatpush.msra.mxu0 %v154
    %206 = vmatpush.msra.mxu0 %v152
    %207 = vmatpush.msra.mxu0 %v150
    %208 = vmatpush.msra.mxu0 %v148
    %209 = vmatpush.msra.mxu0 %v146
    %210 = vmatpush.msra.mxu0 %v144
    %211 = vmatpush.msra.mxu0 %v142
    %212 = vmatpush.msra.mxu0 %v140
    %213 = vmatpush.msra.mxu0 %v138
    %214 = vmatpush.msra.mxu0 %v136
    %215 = vmatpush.msra.mxu0 %v134
    %216 = vmatpush.msra.mxu0 %v132
    %217 = vmatpush.msra.mxu0 %v130
    %218 = vmatpush.msra.mxu0 %v128
    %219 = vmatpush.msra.mxu0 %v126
    %220 = vmatmul.f32.gmra.mxu0 %v61
    %v221 = vpop.f32.mrf.mxu0
    %v222 = vadd.f32 %v202, %v221
    %223 = vdwg.mxu0
    %224 = vmatpush.msra.mxu0 %v93
    %225 = vmatpush.msra.mxu0 %v91
    %226 = vmatpush.msra.mxu0 %v89
    %227 = vmatpush.msra.mxu0 %v87
    %228 = vmatpush.msra.mxu0 %v85
    %229 = vmatpush.msra.mxu0 %v83
    %230 = vmatpush.msra.mxu0 %v81
    %231 = vmatpush.msra.mxu0 %v79
    %232 = vmatpush.msra.mxu0 %v77
    %233 = vmatpush.msra.mxu0 %v75
    %234 = vmatpush.msra.mxu0 %v73
    %235 = vmatpush.msra.mxu0 %v71
    %236 = vmatpush.msra.mxu0 %v69
    %237 = vmatpush.msra.mxu0 %v67
    %238 = vmatpush.msra.mxu0 %v65
    %239 = vmatpush.msra.mxu0 %v63
    %240 = vmatmul.f32.gmra.mxu0 %v59
    %v241 = vpop.f32.mrf.mxu0
    %v242 = vadd.f32 %v161, %v241
    %243 = vdwg.mxu0
    %244 = vmatpush.msra.mxu0 %v125
    %245 = vmatpush.msra.mxu0 %v123
    %246 = vmatpush.msra.mxu0 %v121
    %247 = vmatpush.msra.mxu0 %v119
    %248 = vmatpush.msra.mxu0 %v117
    %249 = vmatpush.msra.mxu0 %v115
    %250 = vmatpush.msra.mxu0 %v113
    %251 = vmatpush.msra.mxu0 %v111
    %252 = vmatpush.msra.mxu0 %v109
    %253 = vmatpush.msra.mxu0 %v107
    %254 = vmatpush.msra.mxu0 %v105
    %255 = vmatpush.msra.mxu0 %v103
    %256 = vmatpush.msra.mxu0 %v101
    %257 = vmatpush.msra.mxu0 %v99
    %258 = vmatpush.msra.mxu0 %v97
    %259 = vmatpush.msra.mxu0 %v95
    %260 = vmatmul.f32.gmra.mxu0 %v60
    %v261 = vpop.f32.mrf.mxu0
    %v262 = vadd.f32 %v242, %v261
    %263 = vdwg.mxu0
    %264 = vmatpush.msra.mxu0 %v157
    %265 = vmatpush.msra.mxu0 %v155
    %266 = vmatpush.msra.mxu0 %v153
    %267 = vmatpush.msra.mxu0 %v151
    %268 = vmatpush.msra.mxu0 %v149
    %269 = vmatpush.msra.mxu0 %v147
    %270 = vmatpush.msra.mxu0 %v145
    %271 = vmatpush.msra.mxu0 %v143
    %272 = vmatpush.msra.mxu0 %v141
    %273 = vmatpush.msra.mxu0 %v139
    %274 = vmatpush.msra.mxu0 %v137
    %275 = vmatpush.msra.mxu0 %v135
    %276 = vmatpush.msra.mxu0 %v133
    %277 = vmatpush.msra.mxu0 %v131
    %278 = vmatpush.msra.mxu0 %v129
    %279 = vmatpush.msra.mxu0 %v127
    %280 = vmatmul.f32.gmra.mxu0 %v61
    %v281 = vpop.f32.mrf.mxu0
    %v282 = vadd.f32 %v262, %v281
    %283 = vdwg.mxu0
    %284 = vst [vmem:[#allocation2] sm:$0xff] %v222
    %285 = vst [vmem:[#allocation2 + $0x8] sm:$0xff] %v282
    %v286 = vld [vmem:[%s3] sm:$0xff]
    %v287 = vld [vmem:[%s3 + $0x8] sm:$0xff]
    %v288 = vld [vmem:[%s3 + $0x10] sm:$0xff]
    %v289 = vld [vmem:[%s3 + $0x18] sm:$0xff]
    %v290 = vld [vmem:[%s3 + $0x20] sm:$0xff]
    %v291 = vld [vmem:[%s3 + $0x28] sm:$0xff]
    %v292 = vld [vmem:[%s3 + $0x30] sm:$0xff]
    %v293 = vld [vmem:[%s3 + $0x38] sm:$0xff]
    %v294 = vld [vmem:[%s3 + $0x40] sm:$0xff]
    %v295 = vld [vmem:[%s3 + $0x48] sm:$0xff]
    %v296 = vld [vmem:[%s3 + $0x50] sm:$0xff]
    %v297 = vld [vmem:[%s3 + $0x58] sm:$0xff]
    %v298 = vld [vmem:[%s3 + $0x60] sm:$0xff]
    %v299 = vld [vmem:[%s3 + $0x68] sm:$0xff]
    %v300 = vld [vmem:[%s3 + $0x70] sm:$0xff]
    %v301 = vld [vmem:[%s3 + $0x78] sm:$0xff]
    %v302 = vlaneseq
    %v303 = vand.u32 %v302, 127
    %v304 = vadd.s32 %v303, 128
    %vm305 = vcmp.ge.s32.totalorder %v303, 128
    %vm306 = vcmp.ge.s32.totalorder %v304, 128
    %vm307 = vcmp.lt.s32.totalorder %v303, 192
    %vm308 = vcmp.lt.s32.totalorder %v304, 192
    %vm309 = vmand %vm305, %vm307
    %vm310 = vmand %vm306, %vm308
    %v311 = vsel %vm309, 1.0, 0.5
    %v312 = vsel %vm310, 1.0, 0.5
    %v313 = vsel %vm309, 0.0, 0.5
    %v314 = vsel %vm310, 0.0, 0.5
    %v315 = vld [vmem:[#allocation2] ss:$8 sm:$0x3]
    %v317 = vperm.slane %v315, 0
    %v318 = vperm.slane %v315, 1
    %vm321 = vcmask 523264
    %v323 = vsel %vm321, 0.0, 0
    %325 = vmatpush.msra.mxu0 0.0
    %326 = vmatpush.msra.mxu0 0.0
    %327 = vmatpush.msra.mxu0 0.0
    %328 = vmatpush.msra.mxu0 0.0
    %329 = vmatpush.msra.mxu0 0.0
    %330 = vmatpush.msra.mxu0 0.0
    %331 = vmatpush.msra.mxu0 0.0
    %332 = vmatpush.msra.mxu0 0.0
    %333 = vmatpush.msra.mxu0 %v300
    %334 = vmatpush.msra.mxu0 %v298
    %335 = vmatpush.msra.mxu0 %v296
    %336 = vmatpush.msra.mxu0 %v294
    %337 = vmatpush.msra.mxu0 %v292
    %338 = vmatpush.msra.mxu0 %v290
    %339 = vmatpush.msra.mxu0 %v288
    %340 = vmatpush.msra.mxu0 %v286
    %341 = vmatmul.f32.gmra.mxu0 %v323
    %v342 = vpop.f32.mrf.mxu0
    %v343 = vadd.f32 %v317, %v342
    %344 = vdwg.mxu0
    %345 = vmatpush.msra.mxu0 0.0
    %346 = vmatpush.msra.mxu0 0.0
    %347 = vmatpush.msra.mxu0 0.0
    %348 = vmatpush.msra.mxu0 0.0
    %349 = vmatpush.msra.mxu0 0.0
    %350 = vmatpush.msra.mxu0 0.0
    %351 = vmatpush.msra.mxu0 0.0
    %352 = vmatpush.msra.mxu0 0.0
    %353 = vmatpush.msra.mxu0 %v301
    %354 = vmatpush.msra.mxu0 %v299
    %355 = vmatpush.msra.mxu0 %v297
    %356 = vmatpush.msra.mxu0 %v295
    %357 = vmatpush.msra.mxu0 %v293
    %358 = vmatpush.msra.mxu0 %v291
    %359 = vmatpush.msra.mxu0 %v289
    %360 = vmatpush.msra.mxu0 %v287
    %361 = vmatmul.f32.gmra.mxu0 %v323
    %v362 = vpop.f32.mrf.mxu0
    %v363 = vadd.f32 %v318, %v362
    %364 = vdwg.mxu0
    %v365 = vtanh.pop %v343
    %v366 = vtanh.pop %v363
    %v367 = vmul.f32 %v365, %v311
    %v368 = vmul.f32 %v366, %v312
    %v369 = vadd.f32 %v367, %v313
    %v370 = vadd.f32 %v368, %v314
    %v371 = vmul.f32 %v369, 0.0
    %v372 = vmul.f32 %v369, %v370
    %374 = vrot.lane.b32.xlu0 %v372, 64
    %v375 = vpop.permute.xlu0 %374
    %v377 = vadd.f32 %v371, %v375
    %v378 = vtanh.pop %v377
    %v379 = vmul.f32 %v370, %v378
    %381 = vrot.lane.b32.xlu0 %v379, 64
    %v382 = vpop.permute.xlu0 %381
    %vm384 = vcmask 516096
    %385 = vst.msk [vmem:[#allocation3] sm:$0x1] %vm384, %v382
    %s386 = scalar_lea.vmem [#allocation2], 1
    %v387 = vld [vmem:[%s386] ss:$8 sm:$0x3]
    %v389 = vperm.slane %v387, 0
    %v390 = vperm.slane %v387, 1
    %v393 = vsel %vm321, %v382, 0
    %395 = vmatpush.msra.mxu0 0.0
    %396 = vmatpush.msra.mxu0 0.0
    %397 = vmatpush.msra.mxu0 0.0
    %398 = vmatpush.msra.mxu0 0.0
    %399 = vmatpush.msra.mxu0 0.0
    %400 = vmatpush.msra.mxu0 0.0
    %401 = vmatpush.msra.mxu0 0.0
    %402 = vmatpush.msra.mxu0 0.0
    %403 = vmatpush.msra.mxu0 %v300
    %404 = vmatpush.msra.mxu0 %v298
    %405 = vmatpush.msra.mxu0 %v296
    %406 = vmatpush.msra.mxu0 %v294
    %407 = vmatpush.msra.mxu0 %v292
    %408 = vmatpush.msra.mxu0 %v290
    %409 = vmatpush.msra.mxu0 %v288
    %410 = vmatpush.msra.mxu0 %v286
    %411 = vmatmul.f32.gmra.mxu0 %v393
    %v412 = vpop.f32.mrf.mxu0
    %v413 = vadd.f32 %v389, %v412
    %414 = vdwg.mxu0
    %415 = vmatpush.msra.mxu0 0.0
    %416 = vmatpush.msra.mxu0 0.0
    %417 = vmatpush.msra.mxu0 0.0
    %418 = vmatpush.msra.mxu0 0.0
    %419 = vmatpush.msra.mxu0 0.0
    %420 = vmatpush.msra.mxu0 0.0
    %421 = vmatpush.msra.mxu0 0.0
    %422 = vmatpush.msra.mxu0 0.0
    %423 = vmatpush.msra.mxu0 %v301
    %424 = vmatpush.msra.mxu0 %v299
    %425 = vmatpush.msra.mxu0 %v297
    %426 = vmatpush.msra.mxu0 %v295
    %427 = vmatpush.msra.mxu0 %v293
    %428 = vmatpush.msra.mxu0 %v291
    %429 = vmatpush.msra.mxu0 %v289
    %430 = vmatpush.msra.mxu0 %v287
    %431 = vmatmul.f32.gmra.mxu0 %v393
    %v432 = vpop.f32.mrf.mxu0
    %v433 = vadd.f32 %v390, %v432
    %434 = vdwg.mxu0
    %v435 = vtanh.pop %v413
    %v436 = vtanh.pop %v433
    %v437 = vmul.f32 %v435, %v311
    %v438 = vmul.f32 %v436, %v312
    %v439 = vadd.f32 %v437, %v313
    %v440 = vadd.f32 %v438, %v314
    %v441 = vmul.f32 %v439, %v377
    %v442 = vmul.f32 %v439, %v440
    %444 = vrot.lane.b32.xlu0 %v442, 64
    %v445 = vpop.permute.xlu0 %444
    %v447 = vadd.f32 %v441, %v445
    %v448 = vtanh.pop %v447
    %v449 = vmul.f32 %v440, %v448
    %451 = vrot.lane.b32.xlu0 %v449, 64
    %v452 = vpop.permute.xlu0 %451
    %454 = vst.msk [vmem:[#allocation3 + $0x1] sm:$0x1] %vm384, %v452
    %s455 = scalar_lea.vmem [#allocation2], 2
    %v456 = vld [vmem:[%s455] ss:$8 sm:$0x3]
    %v458 = vperm.slane %v456, 0
    %v459 = vperm.slane %v456, 1
    %v462 = vsel %vm321, %v452, 0
    %464 = vmatpush.msra.mxu0 0.0
    %465 = vmatpush.msra.mxu0 0.0
    %466 = vmatpush.msra.mxu0 0.0
    %467 = vmatpush.msra.mxu0 0.0
    %468 = vmatpush.msra.mxu0 0.0
    %469 = vmatpush.msra.mxu0 0.0
    %470 = vmatpush.msra.mxu0 0.0
    %471 = vmatpush.msra.mxu0 0.0
    %472 = vmatpush.msra.mxu0 %v300
    %473 = vmatpush.msra.mxu0 %v298
    %474 = vmatpush.msra.mxu0 %v296
    %475 = vmatpush.msra.mxu0 %v294
    %476 = vmatpush.msra.mxu0 %v292
    %477 = vmatpush.msra.mxu0 %v290
    %478 = vmatpush.msra.mxu0 %v288
    %479 = vmatpush.msra.mxu0 %v286
    %480 = vmatmul.f32.gmra.mxu0 %v462
    %v481 = vpop.f32.mrf.mxu0
    %v482 = vadd.f32 %v458, %v481
    %483 = vdwg.mxu0
    %484 = vmatpush.msra.mxu0 0.0
    %485 = vmatpush.msra.mxu0 0.0
    %486 = vmatpush.msra.mxu0 0.0
    %487 = vmatpush.msra.mxu0 0.0
    %488 = vmatpush.msra.mxu0 0.0
    %489 = vmatpush.msra.mxu0 0.0
    %490 = vmatpush.msra.mxu0 0.0
    %491 = vmatpush.msra.mxu0 0.0
    %492 = vmatpush.msra.mxu0 %v301
    %493 = vmatpush.msra.mxu0 %v299
    %494 = vmatpush.msra.mxu0 %v297
    %495 = vmatpush.msra.mxu0 %v295
    %496 = vmatpush.msra.mxu0 %v293
    %497 = vmatpush.msra.mxu0 %v291
    %498 = vmatpush.msra.mxu0 %v289
    %499 = vmatpush.msra.mxu0 %v287
    %500 = vmatmul.f32.gmra.mxu0 %v462
    %v501 = vpop.f32.mrf.mxu0
    %v502 = vadd.f32 %v459, %v501
    %503 = vdwg.mxu0
    %v504 = vtanh.pop %v482
    %v505 = vtanh.pop %v502
    %v506 = vmul.f32 %v504, %v311
    %v507 = vmul.f32 %v505, %v312
    %v508 = vadd.f32 %v506, %v313
    %v509 = vadd.f32 %v507, %v314
    %v510 = vmul.f32 %v508, %v447
    %v511 = vmul.f32 %v508, %v509
    %513 = vrot.lane.b32.xlu0 %v511, 64
    %v514 = vpop.permute.xlu0 %513
    %v516 = vadd.f32 %v510, %v514
    %v517 = vtanh.pop %v516
    %v518 = vmul.f32 %v509, %v517
    %520 = vrot.lane.b32.xlu0 %v518, 64
    %v521 = vpop.permute.xlu0 %520
    %523 = vst.msk [vmem:[#allocation3 + $0x2] sm:$0x1] %vm384, %v521
    %s524 = scalar_lea.vmem [#allocation2], 3
    %v525 = vld [vmem:[%s524] ss:$8 sm:$0x3]
    %v527 = vperm.slane %v525, 0
    %v528 = vperm.slane %v525, 1
    %v531 = vsel %vm321, %v521, 0
    %533 = vmatpush.msra.mxu0 0.0
    %534 = vmatpush.msra.mxu0 0.0
    %535 = vmatpush.msra.mxu0 0.0
    %536 = vmatpush.msra.mxu0 0.0
    %537 = vmatpush.msra.mxu0 0.0
    %538 = vmatpush.msra.mxu0 0.0
    %539 = vmatpush.msra.mxu0 0.0
    %540 = vmatpush.msra.mxu0 0.0
    %541 = vmatpush.msra.mxu0 %v300
    %542 = vmatpush.msra.mxu0 %v298
    %543 = vmatpush.msra.mxu0 %v296
    %544 = vmatpush.msra.mxu0 %v294
    %545 = vmatpush.msra.mxu0 %v292
    %546 = vmatpush.msra.mxu0 %v290
    %547 = vmatpush.msra.mxu0 %v288
    %548 = vmatpush.msra.mxu0 %v286
    %549 = vmatmul.f32.gmra.mxu0 %v531
    %v550 = vpop.f32.mrf.mxu0
    %v551 = vadd.f32 %v527, %v550
    %552 = vdwg.mxu0
    %553 = vmatpush.msra.mxu0 0.0
    %554 = vmatpush.msra.mxu0 0.0
    %555 = vmatpush.msra.mxu0 0.0
    %556 = vmatpush.msra.mxu0 0.0
    %557 = vmatpush.msra.mxu0 0.0
    %558 = vmatpush.msra.mxu0 0.0
    %559 = vmatpush.msra.mxu0 0.0
    %560 = vmatpush.msra.mxu0 0.0
    %561 = vmatpush.msra.mxu0 %v301
    %562 = vmatpush.msra.mxu0 %v299
    %563 = vmatpush.msra.mxu0 %v297
    %564 = vmatpush.msra.mxu0 %v295
    %565 = vmatpush.msra.mxu0 %v293
    %566 = vmatpush.msra.mxu0 %v291
    %567 = vmatpush.msra.mxu0 %v289
    %568 = vmatpush.msra.mxu0 %v287
    %569 = vmatmul.f32.gmra.mxu0 %v531
    %v570 = vpop.f32.mrf.mxu0
    %v571 = vadd.f32 %v528, %v570
    %572 = vdwg.mxu0
    %v573 = vtanh.pop %v551
    %v574 = vtanh.pop %v571
    %v575 = vmul.f32 %v573, %v311
    %v576 = vmul.f32 %v574, %v312
    %v577 = vadd.f32 %v575, %v313
    %v578 = vadd.f32 %v576, %v314
    %v579 = vmul.f32 %v577, %v516
    %v580 = vmul.f32 %v577, %v578
    %582 = vrot.lane.b32.xlu0 %v580, 64
    %v583 = vpop.permute.xlu0 %582
    %v585 = vadd.f32 %v579, %v583
    %v586 = vtanh.pop %v585
    %v587 = vmul.f32 %v578, %v586
    %589 = vrot.lane.b32.xlu0 %v587, 64
    %v590 = vpop.permute.xlu0 %589
    %592 = vst.msk [vmem:[#allocation3 + $0x3] sm:$0x1] %vm384, %v590
    %s593 = scalar_lea.vmem [#allocation2], 4
    %v594 = vld [vmem:[%s593] ss:$8 sm:$0x3]
    %v596 = vperm.slane %v594, 0
    %v597 = vperm.slane %v594, 1
    %v600 = vsel %vm321, %v590, 0
    %602 = vmatpush.msra.mxu0 0.0
    %603 = vmatpush.msra.mxu0 0.0
    %604 = vmatpush.msra.mxu0 0.0
    %605 = vmatpush.msra.mxu0 0.0
    %606 = vmatpush.msra.mxu0 0.0
    %607 = vmatpush.msra.mxu0 0.0
    %608 = vmatpush.msra.mxu0 0.0
    %609 = vmatpush.msra.mxu0 0.0
    %610 = vmatpush.msra.mxu0 %v300
    %611 = vmatpush.msra.mxu0 %v298
    %612 = vmatpush.msra.mxu0 %v296
    %613 = vmatpush.msra.mxu0 %v294
    %614 = vmatpush.msra.mxu0 %v292
    %615 = vmatpush.msra.mxu0 %v290
    %616 = vmatpush.msra.mxu0 %v288
    %617 = vmatpush.msra.mxu0 %v286
    %618 = vmatmul.f32.gmra.mxu0 %v600
    %v619 = vpop.f32.mrf.mxu0
    %v620 = vadd.f32 %v596, %v619
    %621 = vdwg.mxu0
    %622 = vmatpush.msra.mxu0 0.0
    %623 = vmatpush.msra.mxu0 0.0
    %624 = vmatpush.msra.mxu0 0.0
    %625 = vmatpush.msra.mxu0 0.0
    %626 = vmatpush.msra.mxu0 0.0
    %627 = vmatpush.msra.mxu0 0.0
    %628 = vmatpush.msra.mxu0 0.0
    %629 = vmatpush.msra.mxu0 0.0
    %630 = vmatpush.msra.mxu0 %v301
    %631 = vmatpush.msra.mxu0 %v299
    %632 = vmatpush.msra.mxu0 %v297
    %633 = vmatpush.msra.mxu0 %v295
    %634 = vmatpush.msra.mxu0 %v293
    %635 = vmatpush.msra.mxu0 %v291
    %636 = vmatpush.msra.mxu0 %v289
    %637 = vmatpush.msra.mxu0 %v287
    %638 = vmatmul.f32.gmra.mxu0 %v600
    %v639 = vpop.f32.mrf.mxu0
    %v640 = vadd.f32 %v597, %v639
    %641 = vdwg.mxu0
    %v642 = vtanh.pop %v620
    %v643 = vtanh.pop %v640
    %v644 = vmul.f32 %v642, %v311
    %v645 = vmul.f32 %v643, %v312
    %v646 = vadd.f32 %v644, %v313
    %v647 = vadd.f32 %v645, %v314
    %v648 = vmul.f32 %v646, %v585
    %v649 = vmul.f32 %v646, %v647
    %651 = vrot.lane.b32.xlu0 %v649, 64
    %v652 = vpop.permute.xlu0 %651
    %v654 = vadd.f32 %v648, %v652
    %v655 = vtanh.pop %v654
    %v656 = vmul.f32 %v647, %v655
    %658 = vrot.lane.b32.xlu0 %v656, 64
    %v659 = vpop.permute.xlu0 %658
    %661 = vst.msk [vmem:[#allocation3 + $0x4] sm:$0x1] %vm384, %v659
    %s662 = scalar_lea.vmem [#allocation2], 5
    %v663 = vld [vmem:[%s662] ss:$8 sm:$0x3]
    %v665 = vperm.slane %v663, 0
    %v666 = vperm.slane %v663, 1
    %v669 = vsel %vm321, %v659, 0
    %671 = vmatpush.msra.mxu0 0.0
    %672 = vmatpush.msra.mxu0 0.0
    %673 = vmatpush.msra.mxu0 0.0
    %674 = vmatpush.msra.mxu0 0.0
    %675 = vmatpush.msra.mxu0 0.0
    %676 = vmatpush.msra.mxu0 0.0
    %677 = vmatpush.msra.mxu0 0.0
    %678 = vmatpush.msra.mxu0 0.0
    %679 = vmatpush.msra.mxu0 %v300
    %680 = vmatpush.msra.mxu0 %v298
    %681 = vmatpush.msra.mxu0 %v296
    %682 = vmatpush.msra.mxu0 %v294
    %683 = vmatpush.msra.mxu0 %v292
    %684 = vmatpush.msra.mxu0 %v290
    %685 = vmatpush.msra.mxu0 %v288
    %686 = vmatpush.msra.mxu0 %v286
    %687 = vmatmul.f32.gmra.mxu0 %v669
    %v688 = vpop.f32.mrf.mxu0
    %v689 = vadd.f32 %v665, %v688
    %690 = vdwg.mxu0
    %691 = vmatpush.msra.mxu0 0.0
    %692 = vmatpush.msra.mxu0 0.0
    %693 = vmatpush.msra.mxu0 0.0
    %694 = vmatpush.msra.mxu0 0.0
    %695 = vmatpush.msra.mxu0 0.0
    %696 = vmatpush.msra.mxu0 0.0
    %697 = vmatpush.msra.mxu0 0.0
    %698 = vmatpush.msra.mxu0 0.0
    %699 = vmatpush.msra.mxu0 %v301
    %700 = vmatpush.msra.mxu0 %v299
    %701 = vmatpush.msra.mxu0 %v297
    %702 = vmatpush.msra.mxu0 %v295
    %703 = vmatpush.msra.mxu0 %v293
    %704 = vmatpush.msra.mxu0 %v291
    %705 = vmatpush.msra.mxu0 %v289
    %706 = vmatpush.msra.mxu0 %v287
    %707 = vmatmul.f32.gmra.mxu0 %v669
    %v708 = vpop.f32.mrf.mxu0
    %v709 = vadd.f32 %v666, %v708
    %710 = vdwg.mxu0
    %v711 = vtanh.pop %v689
    %v712 = vtanh.pop %v709
    %v713 = vmul.f32 %v711, %v311
    %v714 = vmul.f32 %v712, %v312
    %v715 = vadd.f32 %v713, %v313
    %v716 = vadd.f32 %v714, %v314
    %v717 = vmul.f32 %v715, %v654
    %v718 = vmul.f32 %v715, %v716
    %720 = vrot.lane.b32.xlu0 %v718, 64
    %v721 = vpop.permute.xlu0 %720
    %v723 = vadd.f32 %v717, %v721
    %v724 = vtanh.pop %v723
    %v725 = vmul.f32 %v716, %v724
    %727 = vrot.lane.b32.xlu0 %v725, 64
    %v728 = vpop.permute.xlu0 %727
    %730 = vst.msk [vmem:[#allocation3 + $0x5] sm:$0x1] %vm384, %v728
    %s731 = scalar_lea.vmem [#allocation2], 6
    %v732 = vld [vmem:[%s731] ss:$8 sm:$0x3]
    %v734 = vperm.slane %v732, 0
    %v735 = vperm.slane %v732, 1
    %v738 = vsel %vm321, %v728, 0
    %740 = vmatpush.msra.mxu0 0.0
    %741 = vmatpush.msra.mxu0 0.0
    %742 = vmatpush.msra.mxu0 0.0
    %743 = vmatpush.msra.mxu0 0.0
    %744 = vmatpush.msra.mxu0 0.0
    %745 = vmatpush.msra.mxu0 0.0
    %746 = vmatpush.msra.mxu0 0.0
    %747 = vmatpush.msra.mxu0 0.0
    %748 = vmatpush.msra.mxu0 %v300
    %749 = vmatpush.msra.mxu0 %v298
    %750 = vmatpush.msra.mxu0 %v296
    %751 = vmatpush.msra.mxu0 %v294
    %752 = vmatpush.msra.mxu0 %v292
    %753 = vmatpush.msra.mxu0 %v290
    %754 = vmatpush.msra.mxu0 %v288
    %755 = vmatpush.msra.mxu0 %v286
    %756 = vmatmul.f32.gmra.mxu0 %v738
    %v757 = vpop.f32.mrf.mxu0
    %v758 = vadd.f32 %v734, %v757
    %759 = vdwg.mxu0
    %760 = vmatpush.msra.mxu0 0.0
    %761 = vmatpush.msra.mxu0 0.0
    %762 = vmatpush.msra.mxu0 0.0
    %763 = vmatpush.msra.mxu0 0.0
    %764 = vmatpush.msra.mxu0 0.0
    %765 = vmatpush.msra.mxu0 0.0
    %766 = vmatpush.msra.mxu0 0.0
    %767 = vmatpush.msra.mxu0 0.0
    %768 = vmatpush.msra.mxu0 %v301
    %769 = vmatpush.msra.mxu0 %v299
    %770 = vmatpush.msra.mxu0 %v297
    %771 = vmatpush.msra.mxu0 %v295
    %772 = vmatpush.msra.mxu0 %v293
    %773 = vmatpush.msra.mxu0 %v291
    %774 = vmatpush.msra.mxu0 %v289
    %775 = vmatpush.msra.mxu0 %v287
    %776 = vmatmul.f32.gmra.mxu0 %v738
    %v777 = vpop.f32.mrf.mxu0
    %v778 = vadd.f32 %v735, %v777
    %779 = vdwg.mxu0
    %v780 = vtanh.pop %v758
    %v781 = vtanh.pop %v778
    %v782 = vmul.f32 %v780, %v311
    %v783 = vmul.f32 %v781, %v312
    %v784 = vadd.f32 %v782, %v313
    %v785 = vadd.f32 %v783, %v314
    %v786 = vmul.f32 %v784, %v723
    %v787 = vmul.f32 %v784, %v785
    %789 = vrot.lane.b32.xlu0 %v787, 64
    %v790 = vpop.permute.xlu0 %789
    %v792 = vadd.f32 %v786, %v790
    %v793 = vtanh.pop %v792
    %v794 = vmul.f32 %v785, %v793
    %796 = vrot.lane.b32.xlu0 %v794, 64
    %v797 = vpop.permute.xlu0 %796
    %799 = vst.msk [vmem:[#allocation3 + $0x6] sm:$0x1] %vm384, %v797
    %s800 = scalar_lea.vmem [#allocation2], 7
    %v801 = vld [vmem:[%s800] ss:$8 sm:$0x3]
    %v803 = vperm.slane %v801, 0
    %v804 = vperm.slane %v801, 1
    %v807 = vsel %vm321, %v797, 0
    %809 = vmatpush.msra.mxu0 0.0
    %810 = vmatpush.msra.mxu0 0.0
    %811 = vmatpush.msra.mxu0 0.0
    %812 = vmatpush.msra.mxu0 0.0
    %813 = vmatpush.msra.mxu0 0.0
    %814 = vmatpush.msra.mxu0 0.0
    %815 = vmatpush.msra.mxu0 0.0
    %816 = vmatpush.msra.mxu0 0.0
    %817 = vmatpush.msra.mxu0 %v300
    %818 = vmatpush.msra.mxu0 %v298
    %819 = vmatpush.msra.mxu0 %v296
    %820 = vmatpush.msra.mxu0 %v294
    %821 = vmatpush.msra.mxu0 %v292
    %822 = vmatpush.msra.mxu0 %v290
    %823 = vmatpush.msra.mxu0 %v288
    %824 = vmatpush.msra.mxu0 %v286
    %825 = vmatmul.f32.gmra.mxu0 %v807
    %v826 = vpop.f32.mrf.mxu0
    %v827 = vadd.f32 %v803, %v826
    %828 = vdwg.mxu0
    %829 = vmatpush.msra.mxu0 0.0
    %830 = vmatpush.msra.mxu0 0.0
    %831 = vmatpush.msra.mxu0 0.0
    %832 = vmatpush.msra.mxu0 0.0
    %833 = vmatpush.msra.mxu0 0.0
    %834 = vmatpush.msra.mxu0 0.0
    %835 = vmatpush.msra.mxu0 0.0
    %836 = vmatpush.msra.mxu0 0.0
    %837 = vmatpush.msra.mxu0 %v301
    %838 = vmatpush.msra.mxu0 %v299
    %839 = vmatpush.msra.mxu0 %v297
    %840 = vmatpush.msra.mxu0 %v295
    %841 = vmatpush.msra.mxu0 %v293
    %842 = vmatpush.msra.mxu0 %v291
    %843 = vmatpush.msra.mxu0 %v289
    %844 = vmatpush.msra.mxu0 %v287
    %845 = vmatmul.f32.gmra.mxu0 %v807
    %v846 = vpop.f32.mrf.mxu0
    %v847 = vadd.f32 %v804, %v846
    %848 = vdwg.mxu0
    %v849 = vtanh.pop %v827
    %v850 = vtanh.pop %v847
    %v851 = vmul.f32 %v849, %v311
    %v852 = vmul.f32 %v850, %v312
    %v853 = vadd.f32 %v851, %v313
    %v854 = vadd.f32 %v852, %v314
    %v855 = vmul.f32 %v853, %v792
    %v856 = vmul.f32 %v853, %v854
    %858 = vrot.lane.b32.xlu0 %v856, 64
    %v859 = vpop.permute.xlu0 %858
    %v861 = vadd.f32 %v855, %v859
    %v862 = vtanh.pop %v861
    %v863 = vmul.f32 %v854, %v862
    %865 = vrot.lane.b32.xlu0 %v863, 64
    %v866 = vpop.permute.xlu0 %865
    %868 = vst.msk [vmem:[#allocation3 + $0x7] sm:$0x1] %vm384, %v866
    %v869 = vld [vmem:[#allocation3] sm:$0xff]
    %v870 = vsel %vm321, %v869, 0.0
    %871 = vadd.xlane.f32.xlu0 %v870
    %v872 = vpop.xlane.xlu0 %871
    %v873 = vrcp.pop 64.0
    %v874 = vmul.f32 64.0, %v873
    %v875 = vsub.f32 1.0, %v874
    %v876 = vmul.f32 %v873, %v875
    %v877 = vadd.f32 %v873, %v876
    %vm878 = vweird.f32 %v873
    %v879 = vsel %vm878, %v873, %v877
    %v880 = vmul.f32 %v872, %v879
    %v881 = vsub.f32 %v869, %v880
    %v882 = vmul.f32 %v881, %v881
    %v883 = vsel %vm321, %v882, 0.0
    %884 = vadd.xlane.f32.xlu0 %v883
    %v885 = vpop.xlane.xlu0 %884
    %v886 = vmul.f32 %v885, %v879
    %v887 = vadd.f32 %v886, 1e-05
    %v888 = vrsqrt.pop %v887
    %v889 = vmul.f32 %v888, %v887
    %v890 = vmul.f32 %v889, %v888
    %v891 = vmul.f32 0.5, %v890
    %v892 = vsub.f32 1.5, %v891
    %v893 = vmul.f32 %v888, %v892
    %vm894 = vweird.f32 %v887
    %vm895 = vweird.f32 %v888
    %vm896 = vmor %vm894, %vm895
    %v897 = vsel %vm896, %v888, %v893
    %v898 = vmul.f32 %v881, %v897
    %v899 = vld [vmem:[%s4] sm:$0xff]
    %v900 = vld [vmem:[%s4 + $0x8] sm:$0xff]
    %v901 = vld [vmem:[%s4 + $0x10] sm:$0xff]
    %v902 = vld [vmem:[%s4 + $0x18] sm:$0xff]
    %v903 = vld [vmem:[%s4 + $0x20] sm:$0xff]
    %v904 = vld [vmem:[%s4 + $0x28] sm:$0xff]
    %v905 = vld [vmem:[%s4 + $0x30] sm:$0xff]
    %v906 = vld [vmem:[%s4 + $0x38] sm:$0xff]
    %v907 = vld [vmem:[%s5] sm:$0x1]
    %v909 = vperm.slane %v907, 0
    %v912 = vsel %vm321, %v898, 0
    %914 = vmatpush.msra.mxu0 0.0
    %915 = vmatpush.msra.mxu0 0.0
    %916 = vmatpush.msra.mxu0 0.0
    %917 = vmatpush.msra.mxu0 0.0
    %918 = vmatpush.msra.mxu0 0.0
    %919 = vmatpush.msra.mxu0 0.0
    %920 = vmatpush.msra.mxu0 0.0
    %921 = vmatpush.msra.mxu0 0.0
    %922 = vmatpush.msra.mxu0 %v906
    %923 = vmatpush.msra.mxu0 %v905
    %924 = vmatpush.msra.mxu0 %v904
    %925 = vmatpush.msra.mxu0 %v903
    %926 = vmatpush.msra.mxu0 %v902
    %927 = vmatpush.msra.mxu0 %v901
    %928 = vmatpush.msra.mxu0 %v900
    %929 = vmatpush.msra.mxu0 %v899
    %930 = vmatmul.f32.gmra.mxu0 %v912
    %v931 = vpop.f32.mrf.mxu0
    %v932 = vadd.f32 %v909, %v931
    %933 = vdwg.mxu0
    %v934 = vmax.f32 %v932, 0.0
    %v935 = vld [vmem:[%s6] sm:$0xff]
    %v936 = vld [vmem:[%s6 + $0x8] sm:$0xff]
    %v937 = vld [vmem:[%s6 + $0x10] sm:$0xff]
    %v938 = vld [vmem:[%s6 + $0x18] sm:$0xff]
    %v939 = vld [vmem:[%s7] sm:$0x1]
    %v941 = vperm.slane %v939, 0
    %vm943 = vcmask 261120
    %v945 = vsel %vm943, %v934, 0
    %947 = vmatpush.msra.mxu0 0.0
    %948 = vmatpush.msra.mxu0 0.0
    %949 = vmatpush.msra.mxu0 0.0
    %950 = vmatpush.msra.mxu0 0.0
    %951 = vmatpush.msra.mxu0 0.0
    %952 = vmatpush.msra.mxu0 0.0
    %953 = vmatpush.msra.mxu0 0.0
    %954 = vmatpush.msra.mxu0 0.0
    %955 = vmatpush.msra.mxu0 0.0
    %956 = vmatpush.msra.mxu0 0.0
    %957 = vmatpush.msra.mxu0 0.0
    %958 = vmatpush.msra.mxu0 0.0
    %959 = vmatpush.msra.mxu0 %v938
    %960 = vmatpush.msra.mxu0 %v937
    %961 = vmatpush.msra.mxu0 %v936
    %962 = vmatpush.msra.mxu0 %v935
    %963 = vmatmul.f32.gmra.mxu0 %v945
    %v964 = vpop.f32.mrf.mxu0
    %v965 = vadd.f32 %v941, %v964
    %966 = vdwg.mxu0
    %vm967 = vcmask 23552
    %v968 = vsel %vm967, %v965, -inf
    %969 = vmax.xlane.f32.xlu0 %v968
    %v970 = vpop.xlane.xlu0 %969
    %v971 = vsub.f32 %v965, %v970
    %v972 = vmul.f32 %v971, 1.442695
    %v973 = vpow.pop %v972
    %v974 = vsel %vm967, %v973, 0.0
    %975 = vadd.xlane.f32.xlu0 %v974
    %v976 = vpop.xlane.xlu0 %975
    %v977 = vrcp.pop %v976
    %v978 = vmul.f32 %v976, %v977
    %v979 = vsub.f32 1.0, %v978
    %v980 = vmul.f32 %v977, %v979
    %v981 = vadd.f32 %v977, %v980
    %vm982 = vweird.f32 %v976
    %vm983 = vweird.f32 %v977
    %vm984 = vmor %vm982, %vm983
    %v985 = vsel %vm984, %v977, %v981
    %v986 = vand.u32 2147483647, %v976
    %vm987 = vcmp.eq.f32.partialorder %v986, 8.507059e+37
    %v988 = vand.u32 %v976, 2147483648
    %v989 = vor.u32 1.1754944e-38, %v988
    %v990 = vsel %vm987, %v989, %v985
    %v991 = vmul.f32 %v973, %v990
    %992 = vst.msk [vmem:[%s8] sm:$0xff] %vm967, %v991
    // Predicated region
    $region42: #{tpu_custom_call.1} parent=1 // pred_check
      _
    $region43: #{tpu_custom_call.1} parent=1 // pred_check_branch
      %994 = sbr.rel (0) target = $region45
    $region44: #{tpu_custom_call.1} parent=1 // pred_region
      _
    $region45: #{tpu_custom_call.1} parent=1 // pred_fallthru
      _
    // Predicated region
    $region46: #{tpu_custom_call.1} parent=1 // pred_check
      _
    $region47: #{tpu_custom_call.1} parent=1 // pred_check_branch
      %996 = sbr.rel (0) target = $region49
    $region48: #{tpu_custom_call.1} parent=1 // pred_region
      _
    $region49: #{tpu_custom_call.1} parent=1 // pred_fallthru
      _
    %997 = vsyncpa [#allocation5], 1
    %998 = vsyncpa [#allocation7], 1

</llo_original>
